<compile_context>
chip_gen: v7x
topology: tpu7x:2x2x1
jax: 0.10.0
libtpu: 0.0.40
codegen_flags: <defaults>
</compile_context>

<pallas_src>
import math

import jax
import jax.numpy as jnp
from jax.experimental import pallas as pl
from jax.experimental.pallas import tpu as pltpu


_PER_STEP_BUDGET = 16 << 20   # target bytes per grid step (x + out + pe blocks)


# ----------------------------- PE table ------------------------------------
def _build_pe_table(max_len: int, d_model: int) -> jnp.ndarray:
    """Deterministic sinusoidal table, identical math to the torch __init__."""
    position = jnp.arange(max_len, dtype=jnp.float32)[:, None]            # (L, 1)
    div_term = jnp.exp(
        jnp.arange(0, d_model, 2, dtype=jnp.float32)
        * (-math.log(10000.0) / d_model)
    )                                                                      # (D/2,)
    pe = jnp.zeros((max_len, d_model), dtype=jnp.float32)
    pe = pe.at[:, 0::2].set(jnp.sin(position * div_term))
    pe = pe.at[:, 1::2].set(jnp.cos(position * div_term))
    return pe                                                              # (L, D)


# ----------------------------- planning helpers -----------------------------
def _cdiv(a: int, b: int) -> int:
    return -(-a // b)


def _round_up(x: int, m: int) -> int:
    return _cdiv(x, m) * m


def _sublane_multiple(dtype) -> int:
    """Packed sublane multiple: 8 rows (f32), 16 (bf16), 32 (int8/fp8)."""
    return max(8, 32 // max(jnp.dtype(dtype).itemsize, 1))


def _tpu_info():
    try:
        return pltpu.get_tpu_info()
    except Exception:
        return None


def _num_tensorcores() -> int:
    """Best-effort TensorCore-per-chip count; default 1 (conservative: no
    forced grid split on single-TC v5e/v6e)."""
    info = _tpu_info()
    if info is not None:
        for name in ("tensorcores_per_chip", "num_tensorcores", "cores_per_chip",
                     "num_cores", "core_count"):
            v = getattr(info, name, None)
            if v:
                try:
                    return max(1, int(v))
                except Exception:
                    pass
    return 1


def _vmem_limit_bytes(step_bytes: int) -> int:
    """~3x the per-step working set (double buffering + headroom); never the
    whole per-TC VMEM (64 MiB on v7x)."""
    cap = 64 << 20
    info = _tpu_info()
    if info is not None:
        try:
            cap = int(getattr(info, "vmem_capacity_bytes", cap) or cap)
        except Exception:
            cap = 64 << 20
    hard_cap = max(min((cap * 3) // 4, 48 << 20), 8 << 20)
    return int(min(max(3 * step_bytes, 8 << 20), hard_cap))


def _choose_seq_tile(S: int, row_bytes: int, sub_mult: int, num_tc: int) -> int:
    """Seq-tile so one grid step moves ~_PER_STEP_BUDGET bytes; balanced across
    TensorCores when the chip has more than one."""
    ts = _PER_STEP_BUDGET // max(row_bytes, 1)
    if ts >= S:
        # Whole sequence fits in one step.  Split only when >1 TC can actually
        # run the "parallel" axis concurrently (v7x); otherwise keep one step.
        if num_tc > 1 and S > sub_mult:
            return min(S, _round_up(_cdiv(S, num_tc), sub_mult))
        return S
    ts = max(sub_mult, (ts // sub_mult) * sub_mult)
    ts = min(ts, S)
    if num_tc > 1:
        # Prefer a step count that's a multiple of num_tc with near-equal blocks
        # so neither TC idles a whole step on the critical path.
        nsteps = _round_up(_cdiv(S, ts), num_tc)
        ts = max(sub_mult, min(ts, _round_up(_cdiv(S, nsteps), sub_mult)))
    return ts


def _plan_3d_blocks(S, B, D, itemsize, sub_mult, num_tc):
    """Pick (ts, tb) blocks for the (S, B, D) broadcast path."""
    row_bytes = 2 * B * D * itemsize + 4 * D          # x row + out row + pe row
    if B <= sub_mult or row_bytes * min(sub_mult, S) <= _PER_STEP_BUDGET:
        tb = B
        ts = _choose_seq_tile(S, row_bytes, sub_mult, num_tc)
    else:
        # Minor-axis (batch) tiling: even a minimal seq stripe of the full
        # batch would exceed the per-step budget (large B*D).  Keep one block
        # ~budget-sized so double-buffering fits v7x's 64 MiB VMEM.
        ts = min(sub_mult, S)
        tb = _PER_STEP_BUDGET // max(2 * ts * D * itemsize, 1)
        tb = max(sub_mult, (tb // sub_mult) * sub_mult)
        tb = min(tb, B)
    step_bytes = 2 * ts * tb * D * itemsize + 4 * ts * D
    return ts, tb, step_bytes


# ----------------------------- kernels --------------------------------------
def _pe_add_bcast_kernel(x_ref, pe_ref, o_ref):
    # x_ref/o_ref: (ts, tb, D); pe_ref: (ts, 1, D) -> stride-0 broadcast over
    # the batch dim (no in-kernel relayout of a 2D operand).
    o_ref[...] = (x_ref[...] + pe_ref[...]).astype(o_ref.dtype)


def _make_flat_kernel(batch: int):
    def kernel(x_ref, pe_ref, o_ref):
        # x_ref/o_ref: (ts, B*D); pe_ref: (ts, D).  Replicate pe across the
        # batch on-chip (lane concatenation) instead of materialising an
        # (S, B*D) table in HBM -- PE traffic stays at S*D bytes.
        pe = pe_ref[...]
        if batch > 1:
            pe = jnp.concatenate([pe] * batch, axis=-1)     # (ts, B*D)
        o_ref[...] = (x_ref[...] + pe).astype(o_ref.dtype)
    return kernel


# ----------------------------- wrapper ---------------------------------------
def positional_encoding(x: jnp.ndarray, pe_table: jnp.ndarray, *, donate_x: bool = False):
    """x: (S, B, D); pe_table: (max_len, D) float32.  Returns x + pe[:S]
    (inference mode: dropout is the identity).

    Set donate_x=True (and donate x at the jit level) to alias the output onto
    x's HBM buffer via input_output_aliases -- only when x is dead afterwards.
    """
    S, B, D = x.shape
    assert pe_table.shape[0] >= S and pe_table.shape[1] == D
    pe_slice = pe_table[:S, :]                          # (S, D) float32
    itemsize = jnp.dtype(x.dtype).itemsize
    sub_mult = _sublane_multiple(x.dtype)
    num_tc = _num_tensorcores()
    aliases = {0: 0} if donate_x else {}

    C = B * D
    flat_row_bytes = 2 * C * itemsize + 4 * D
    # Flat (lane-dense) path only for narrow D with modest batch; everything
    # else (including large B*D) goes through the 3D broadcast path.
    use_flat = (D < 128) and (B <= 128) and \
        (flat_row_bytes * min(sub_mult, S) <= _PER_STEP_BUDGET)

    if not use_flat:
        # ---- Path 1: 3D broadcast (PE traffic = S*D, not S*B*D) ------------
        ts, tb, step_bytes = _plan_3d_blocks(S, B, D, itemsize, sub_mult, num_tc)
        grid = (_cdiv(S, ts), _cdiv(B, tb))
        pe_3d = pe_slice[:, None, :]                    # (S, 1, D)
        return pl.pallas_call(
            _pe_add_bcast_kernel,
            out_shape=jax.ShapeDtypeStruct((S, B, D), x.dtype),
            grid_spec=pltpu.PrefetchScalarGridSpec(
                num_scalar_prefetch=0,
                grid=grid,
                in_specs=[
                    pl.BlockSpec((ts, tb, D), lambda i, j: (i, j, 0)),
                    pl.BlockSpec((ts, 1, D), lambda i, j: (i, 0, 0)),
                ],
                out_specs=pl.BlockSpec((ts, tb, D), lambda i, j: (i, j, 0)),
            ),
            compiler_params=pltpu.CompilerParams(
                dimension_semantics=("parallel", "parallel"),
                vmem_limit_bytes=_vmem_limit_bytes(step_bytes)),
            input_output_aliases=aliases,
        )(x, pe_3d)

    # ---- Path 2: lane-dense flattened form for small D (< 128) --------------
    x_flat = x.reshape(S, C)
    ts = _choose_seq_tile(S, flat_row_bytes, sub_mult, num_tc)
    step_bytes = 2 * ts * C * itemsize + 4 * ts * D
    grid = (_cdiv(S, ts),)
    out_flat = pl.pallas_call(
        _make_flat_kernel(B),
        out_shape=jax.ShapeDtypeStruct((S, C), x.dtype),
        grid_spec=pltpu.PrefetchScalarGridSpec(
            num_scalar_prefetch=0,
            grid=grid,
            in_specs=[
                pl.BlockSpec((ts, C), lambda i: (i, 0)),
                pl.BlockSpec((ts, D), lambda i: (i, 0)),
            ],
            out_specs=pl.BlockSpec((ts, C), lambda i: (i, 0)),
        ),
        compiler_params=pltpu.CompilerParams(
            dimension_semantics=("parallel",),
            vmem_limit_bytes=_vmem_limit_bytes(step_bytes)),
        input_output_aliases=aliases,
    )(x_flat, pe_slice)
    return out_flat.reshape(S, B, D)


if __name__ == "__main__":
    key = jax.random.PRNGKey(0)
    k1, k2 = jax.random.split(key)

    # Case 1: small shape matching the module's forward (seq, batch, d_model),
    # exercises the lane-dense flattened path (D=32 < 128), PE replicated
    # on-chip (no batch-expanded table in HBM).
    S, B, D = 8, 2, 32
    MAX_LEN = 64
    x = jax.random.normal(k1, (S, B, D), dtype=jnp.float32)
    pe_table = _build_pe_table(MAX_LEN, D)
    ref = x + pe_table[:S, None, :]
    out = jax.block_until_ready(positional_encoding(x, pe_table))
    assert out.shape == (S, B, D) and out.dtype == x.dtype
    assert jnp.allclose(out, ref, atol=1e-6), "mismatch vs reference (flat path)"

    # Case 2: lane-wide shape (D=128), exercises the 3D broadcast path with the
    # (S, 1, D) stride-0 PE block.
    S2, B2, D2 = 16, 8, 128
    x2 = jax.random.normal(k2, (S2, B2, D2), dtype=jnp.float32)
    pe_table2 = _build_pe_table(32, D2)
    ref2 = x2 + pe_table2[:S2, None, :]
    out2 = jax.block_until_ready(positional_encoding(x2, pe_table2))
    assert out2.shape == (S2, B2, D2) and out2.dtype == x2.dtype
    assert jnp.allclose(out2, ref2, atol=1e-6), "mismatch vs reference (3D path)"

    print("KERNEL_OK")
</pallas_src>

<mosaic_0001>
module attributes {stable_mosaic.version = 11 : i64} {
  func.func @kernel(%arg0: i32, %arg1: memref<8x64xf32, #tpu.memory_space<vmem>>, %arg2: memref<8x32xf32, #tpu.memory_space<vmem>>, %arg3: memref<8x64xf32, #tpu.memory_space<vmem>>) attributes {dimension_semantics = [#tpu.dimension_semantics<parallel>], iteration_bounds = array<i64: 1>, scalar_prefetch = 0 : i64, scratch_operands = 0 : i64, tpu.core_type = #tpu.core_type<tc>, window_params = [{transform_indices = @transform_0, window_bounds = array<i64: 8, 64>}, {transform_indices = @transform_1, window_bounds = array<i64: 8, 32>}, {transform_indices = @transform_2, window_bounds = array<i64: 8, 64>}]} {
    %c0 = arith.constant 0 : index
    %c0_0 = arith.constant 0 : index
    %0 = vector.load %arg2[%c0, %c0_0] : memref<8x32xf32, #tpu.memory_space<vmem>>, vector<8x32xf32>
    %1 = tpu.concatenate %0, %0 in 1 : vector<8x32xf32>, vector<8x32xf32> -> vector<8x64xf32>
    %c0_1 = arith.constant 0 : index
    %c0_2 = arith.constant 0 : index
    %2 = vector.load %arg1[%c0_1, %c0_2] : memref<8x64xf32, #tpu.memory_space<vmem>>, vector<8x64xf32>
    %3 = arith.addf %2, %1 : vector<8x64xf32>
    %c0_3 = arith.constant 0 : index
    %c0_4 = arith.constant 0 : index
    %4 = vector.load %arg3[%c0_3, %c0_4] : memref<8x64xf32, #tpu.memory_space<vmem>>, vector<8x64xf32>
    tpu.vector_store %arg3[%c0_3, %c0_4], %3 {strides = array<i32>} : memref<8x64xf32, #tpu.memory_space<vmem>>, vector<8x64xf32>,
    return
  }
  func.func @transform_0(%arg0: i32) -> (i32, i32) {
    %c0_i32 = arith.constant 0 : i32
    %c0_i32_0 = arith.constant 0 : i32
    return %arg0, %c0_i32 : i32, i32
  }
  func.func @transform_1(%arg0: i32) -> (i32, i32) {
    %c0_i32 = arith.constant 0 : i32
    %c0_i32_0 = arith.constant 0 : i32
    return %arg0, %c0_i32 : i32, i32
  }
  func.func @transform_2(%arg0: i32) -> (i32, i32) {
    %c0_i32 = arith.constant 0 : i32
    %c0_i32_0 = arith.constant 0 : i32
    return %arg0, %c0_i32 : i32, i32
  }
}

</mosaic_0001>

<llo_original>
// kernel: tpu_custom_call.1
$region0: #{tpu_custom_call.1}
  #allocation0 [shape = 'u32[]', space=smem, size = 0x4, offset = 0x4, fixed_abs, tag = 'smem constant byte address 0x4 - core index']
  #allocation1 [shape = 'u32[144,128]{1,0:T(1,128)}', space=vmem, size = 0x12000, scoped, tag = 'internal scratch']
  %s0 = inlined_call_operand.hbm [shape: f32[8,64], index: 0, kind: input, shape index: {}]
  %s1 = inlined_call_operand.hbm [shape: f32[8,32], index: 1, kind: input, shape index: {}]
  %s2 = inlined_call_operand.hbm [shape: f32[8,64], index: 2, kind: output, shape index: {}]
  %s3 = sld [smem:[#allocation0]]
  $region26: #{tpu_custom_call.1} parent=0
    _
  %s5 = ssub.s32 1, %s3
  %s6 = scalar_select 0, %s5, %s3
  $region1: #{tpu_custom_call.1} parent=0
    #allocation2 [shape = 'u8[4096]{0}', space=vmem, size = 0x1000, scoped, tag = 'input window, operand 0, single buffered']
    #allocation3 [shape = 's32[1]{0}', space=sflag, size = 0x4, scoped, tag = 'scoped memory for tpu_custom_call.1']
    #allocation4 [shape = 's32[1]{0}', space=sflag, size = 0x4, scoped, tag = 'scoped memory for tpu_custom_call.1']
    #allocation5 [shape = 'u8[4096]{0}', space=vmem, size = 0x1000, scoped, tag = 'input window, operand 1, single buffered']
    #allocation6 [shape = 's32[1]{0}', space=sflag, size = 0x4, scoped, tag = 'scoped memory for tpu_custom_call.1']
    #allocation7 [shape = 'u8[4096]{0}', space=vmem, size = 0x1000, scoped, tag = 'output window, operand 0, single buffered']
    %7 = vsyncpa [#allocation3], 0
    %8 = vsyncpa [#allocation6], 0
    %9 = vsyncpa [#allocation4], 0
    // Predicated region
    $region2: #{tpu_custom_call.1} parent=1 // pred_check
      _
    $region3: #{tpu_custom_call.1} parent=1 // pred_check_branch
      %11 = sbr.rel (0) target = $region5
    $region4: #{tpu_custom_call.1} parent=1 // pred_region
      %s13 = ssub.s32 128, 128
      %14 = vsyncadd [#allocation3], %s13
      %s16 = sshll.u32 [#allocation2], 4
      %s17 = int_to_ptr.vmem [resolvable:$true] %s16
      %19 = dma.hbm_to_vmem [thread:$0]  %s0, 128, %s17, [#allocation3]
    $region5: #{tpu_custom_call.1} parent=1 // pred_fallthru
      _
    // Predicated region
    $region6: #{tpu_custom_call.1} parent=1 // pred_check
      _
    $region7: #{tpu_custom_call.1} parent=1 // pred_check_branch
      %21 = sbr.rel (0) target = $region9
    $region8: #{tpu_custom_call.1} parent=1 // pred_region
      %s23 = ssub.s32 128, 128
      %24 = vsyncadd [#allocation6], %s23
      %s26 = sshll.u32 [#allocation5], 4
      %s27 = int_to_ptr.vmem [resolvable:$true] %s26
      %29 = dma.hbm_to_vmem [thread:$0]  %s1, 128, %s27, [#allocation6]
    $region9: #{tpu_custom_call.1} parent=1 // pred_fallthru
      _
    // Predicated region
    $region10: #{tpu_custom_call.1} parent=1 // pred_check
      _
    $region11: #{tpu_custom_call.1} parent=1 // pred_check_branch
      %31 = sbr.rel (0) target = $region13
    $region12: #{tpu_custom_call.1} parent=1 // pred_region
      %32 = dma.done [#allocation3], 128
    $region13: #{tpu_custom_call.1} parent=1 // pred_fallthru
      _
    // Predicated region
    $region14: #{tpu_custom_call.1} parent=1 // pred_check
      _
    $region15: #{tpu_custom_call.1} parent=1 // pred_check_branch
      %34 = sbr.rel (0) target = $region17
    $region16: #{tpu_custom_call.1} parent=1 // pred_region
      %35 = dma.done [#allocation6], 128
    $region17: #{tpu_custom_call.1} parent=1 // pred_fallthru
      _
    %v36 = vld [vmem:[#allocation5] sm:$0xff]
    %38 = vrot.lane.b32.xlu0 %v36, 32
    %v39 = vpop.permute.xlu0 %38
    %vm41 = vcmask 261120
    %v42 = vsel %vm41, %v36, %v39
    %v43 = vld [vmem:[#allocation2] sm:$0xff]
    %v44 = vadd.f32 %v43, %v42
    %vm45 = vcmask 523264
    %46 = vst.msk [vmem:[#allocation7] sm:$0xff] %vm45, %v44
    // Predicated region
    $region18: #{tpu_custom_call.1} parent=1 // pred_check
      _
    $region19: #{tpu_custom_call.1} parent=1 // pred_check_branch
      %48 = sbr.rel (0) target = $region21
    $region20: #{tpu_custom_call.1} parent=1 // pred_region
      %s50 = ssub.s32 128, 128
      %51 = vsyncadd [#allocation4], %s50
      %s53 = sshll.u32 [#allocation7], 4
      %s54 = int_to_ptr.vmem [resolvable:$true] %s53
      %56 = dma.vmem_to_hbm [thread:$0]  %s54, 128, %s2, [#allocation4]
    $region21: #{tpu_custom_call.1} parent=1 // pred_fallthru
      _
    // Predicated region
    $region22: #{tpu_custom_call.1} parent=1 // pred_check
      _
    $region23: #{tpu_custom_call.1} parent=1 // pred_check_branch
      %58 = sbr.rel (0) target = $region25
    $region24: #{tpu_custom_call.1} parent=1 // pred_region
      %59 = dma.done [#allocation4], 128
    $region25: #{tpu_custom_call.1} parent=1 // pred_fallthru
      _
    %60 = vsyncpa [#allocation3], 1
    %61 = vsyncpa [#allocation6], 1
    %62 = vsyncpa [#allocation4], 1

</llo_original>
